<compile_context>
chip_gen: v6e
topology: v6e:2x2x1
jax: 0.10.0
libtpu: 0.0.40
codegen_flags: <defaults>
</compile_context>

<pallas_src>
import functools

import jax
import jax.numpy as jnp
import numpy as np
from jax import lax
from jax.experimental import pallas as pl
from jax.experimental.pallas import tpu as pltpu

SCALE_CLS = 20.0
_EPS = 1e-12   # F.normalize eps


def _round_up(x, m):
    return ((x + m - 1) // m) * m


def _l2_normalize(x, eps=_EPS):
    # == F.normalize(x, p=2, dim=-1, eps): x / max(||x||_2, eps)
    ssq = jnp.sum(x * x, axis=-1, keepdims=True)
    return x * lax.rsqrt(jnp.maximum(ssq, eps * eps))


def _pick_tile_b(batch):
    # Multiple-of-8 batch tile; prefer one that divides B (no pad copy of the
    # dominant tensor) and gives >= 2 grid steps on the "parallel" batch axis
    # (v7x megacore).
    for cand in (32, 16, 8):
        if batch % cand == 0 and batch // cand >= 2:
            return cand
    for cand in (16, 8):
        if batch % cand == 0:
            return cand
    return 8


def _pick_tile_c(channels):
    # Channel-reduction tile (C = 2048 for ResNet-101 -> 512).
    for cand in (512, 256, 128, 64, 32, 16, 8):
        if channels % cand == 0:
            return cand
    return channels


def _vmem_limit_bytes():
    # Headroom above the default scoped limit (16 MiB on v5e) while staying
    # comfortably under physical VMEM on every chip generation.
    try:
        cap = pltpu.get_tpu_info().vmem_capacity_bytes
        return int(min(64 * 1024 * 1024, (3 * cap) // 4))
    except Exception:
        return None   # unknown chip: keep the compiler default


def _compiler_params(dim_sem):
    limit = _vmem_limit_bytes()
    kwargs = dict(dimension_semantics=dim_sem)
    if limit is not None:
        kwargs["vmem_limit_bytes"] = limit
    return pltpu.CompilerParams(**kwargs)


# ---------------------------------------------------------------------------
# Kernel 1 (eval): avg-pool -> V2S -> L2-normalize -> scaled cosine scores
# ---------------------------------------------------------------------------
def coarse_scores_kernel(xmap_ref, w_ref, attT_ref, out_ref, acc_ref):
    # xmap_ref: (TILE_B, TILE_C, HW)  bf16/f32, HW on the lane axis
    # w_ref   : (TILE_C, A)           V2S weight slice, 1/HW pre-folded
    # attT_ref: (A, N_pad)            L2-normalized, scale_cls-folded, transposed
    # out_ref : (TILE_B, N_pad)       lane-dense scaled cosine scores
    # acc_ref : VMEM (TILE_B, A) f32  pre-attr accumulator across C tiles
    c = pl.program_id(1)

    @pl.when(c == 0)
    def _init():
        acc_ref[...] = jnp.zeros_like(acc_ref)

    x = xmap_ref[...].astype(jnp.float32)          # bf16 DMA, f32 reduce
    pooled = jnp.sum(x, axis=-1)                   # (TB, TC): pool over HW
    acc_ref[...] += jnp.dot(pooled, w_ref[...],
                            preferred_element_type=jnp.float32)

    @pl.when(c == pl.num_programs(1) - 1)
    def _fin():
        pre = acc_ref[...]
        ssq = jnp.sum(pre * pre, axis=-1, keepdims=True)
        pre_n = pre * lax.rsqrt(jnp.maximum(ssq, _EPS * _EPS))     # EUP rsqrt
        out_ref[...] = jnp.dot(pre_n, attT_ref[...],
                               preferred_element_type=jnp.float32)


# ---------------------------------------------------------------------------
# Kernel 2 (training): scores fused with cross-entropy; per-tile partial sums
# ---------------------------------------------------------------------------
def coarse_loss_kernel(xmap_ref, w_ref, attT_ref, onehot_ref, loss_ref, acc_ref,
                       *, batch, tile_b):
    b = pl.program_id(0)
    c = pl.program_id(1)

    @pl.when(c == 0)
    def _init():
        acc_ref[...] = jnp.zeros_like(acc_ref)

    x = xmap_ref[...].astype(jnp.float32)
    pooled = jnp.sum(x, axis=-1)                                   # (TB, TC)
    acc_ref[...] += jnp.dot(pooled, w_ref[...],
                            preferred_element_type=jnp.float32)

    @pl.when(c == pl.num_programs(1) - 1)
    def _fin():
        pre = acc_ref[...]
        ssq = jnp.sum(pre * pre, axis=-1, keepdims=True)
        pre_n = pre * lax.rsqrt(jnp.maximum(ssq, _EPS * _EPS))
        s = jnp.dot(pre_n, attT_ref[...],
                    preferred_element_type=jnp.float32)            # (TB, Ns)
        m = jnp.max(s, axis=-1, keepdims=True)
        lse = m + jnp.log(jnp.sum(jnp.exp(s - m), axis=-1, keepdims=True))
        tgt = jnp.sum(s * onehot_ref[...], axis=-1, keepdims=True)  # (TB, 1)
        row = lax.broadcasted_iota(jnp.int32, (tile_b, 1), 0) + b * tile_b
        per_row = jnp.where(row < batch, lse - tgt, 0.0)            # mask pad
        loss_ref[0] = jnp.sum(per_row)           # this batch-tile's CE sum


# ---------------------------------------------------------------------------
# pallas_call plumbing
# ---------------------------------------------------------------------------
def _scores_call(xmap, wT, attT, tile_b, tile_c):
    b_pad, C, hw = xmap.shape
    a, n_pad = attT.shape
    grid = (b_pad // tile_b, C // tile_c)
    return pl.pallas_call(
        coarse_scores_kernel,
        out_shape=jax.ShapeDtypeStruct((b_pad, n_pad), jnp.float32),
        grid_spec=pltpu.PrefetchScalarGridSpec(
            num_scalar_prefetch=0,
            grid=grid,
            in_specs=[
                pl.BlockSpec((tile_b, tile_c, hw), lambda i, c: (i, c, 0)),
                pl.BlockSpec((tile_c, a), lambda i, c: (c, 0)),
                pl.BlockSpec((a, n_pad), lambda i, c: (0, 0)),   # resident att
            ],
            out_specs=pl.BlockSpec((tile_b, n_pad), lambda i, c: (i, 0)),
            scratch_shapes=[pltpu.VMEM((tile_b, a), jnp.float32)],
        ),
        compiler_params=_compiler_params(("parallel", "arbitrary")),
    )(xmap, wT, attT)


def _loss_call(xmap, wT, attT, onehot, batch, tile_b, tile_c):
    b_pad, C, hw = xmap.shape
    a, n_seen = attT.shape
    n_b = b_pad // tile_b
    grid = (n_b, C // tile_c)
    kernel = functools.partial(coarse_loss_kernel, batch=batch, tile_b=tile_b)
    return pl.pallas_call(
        kernel,
        out_shape=jax.ShapeDtypeStruct((n_b,), jnp.float32),
        grid_spec=pltpu.PrefetchScalarGridSpec(
            num_scalar_prefetch=0,
            grid=grid,
            in_specs=[
                pl.BlockSpec((tile_b, tile_c, hw), lambda i, c: (i, c, 0)),
                pl.BlockSpec((tile_c, a), lambda i, c: (c, 0)),
                pl.BlockSpec((a, n_seen), lambda i, c: (0, 0)),
                pl.BlockSpec((tile_b, n_seen), lambda i, c: (i, 0)),
            ],
            out_specs=pl.BlockSpec(
                (1,), lambda i, c: (i,),
                memory_space=pltpu.MemorySpace.SMEM),
            scratch_shapes=[pltpu.VMEM((tile_b, a), jnp.float32)],
        ),
        compiler_params=_compiler_params(("parallel", "arbitrary")),
    )(xmap, wT, attT, onehot)


@functools.partial(jax.jit, static_argnames=("training",))
def coarse_align_forward(x_fea_map, v2s_weight, seen_att, unseen_att,
                         x_label=None, training=False):
    """Mirrors Coarse_Align.forward after the backbone.

    training=True  -> scalar V2S_loss (CE over seen classes)
    training=False -> (B, n_seen + n_unseen) scaled cosine scores
    """
    B, C, H, W = x_fea_map.shape
    hw = H * W
    tile_b = _pick_tile_b(B)
    tile_c = _pick_tile_c(C)
    b_pad = _round_up(B, tile_b)

    # Free NCHW -> (B, C, HW) reshape: no HBM transpose pass; the avg-pool
    # happens in-kernel over the HW lane axis.
    xmap = x_fea_map.reshape(B, C, hw)
    # DMA the dominant tensor in bf16 (kernel upcasts to f32 before reducing).
    if xmap.dtype != jnp.bfloat16:
        xmap = xmap.astype(jnp.bfloat16)
    if b_pad != B:
        xmap = jnp.pad(xmap, ((0, b_pad - B), (0, 0), (0, 0)))

    # V2S weight pre-transposed to (C, A) with the 1/HW average folded in
    # (kernel does a plain sum over HW -> exact same math, one less VPU mul).
    wT = v2s_weight.astype(jnp.float32).T * jnp.float32(1.0 / hw)

    if training:
        att = seen_att.astype(jnp.float32)
        n_seen = att.shape[0]
        attT = (SCALE_CLS * _l2_normalize(att)).T                # (A, n_seen)
        labels = x_label.astype(jnp.int32)
        labels = jnp.pad(labels, (0, b_pad - B))
        # Lane-dense one-hot targets (replaces a lane-sparse (TB,1) int tile).
        onehot = jax.nn.one_hot(labels, n_seen, dtype=jnp.float32)
        parts = _loss_call(xmap, wT, attT, onehot, B, tile_b, tile_c)
        return jnp.sum(parts) / B                                # mean CE
    else:
        att = jnp.concatenate([seen_att, unseen_att], axis=0).astype(jnp.float32)
        n = att.shape[0]
        n_pad = _round_up(n, 128)                                # lane-dense
        attT = (SCALE_CLS * _l2_normalize(att)).T                # (A, n)
        attT = jnp.pad(attT, ((0, 0), (0, n_pad - n)))
        scores = _scores_call(xmap, wT, attT, tile_b, tile_c)
        return scores[:B, :n]


if __name__ == "__main__":
    # Small synthetic shapes consistent with the forward pass
    B, vision_dim, H, W = 2, 32, 8, 8
    attr_dim = 16
    n_seen, n_unseen = 6, 4

    key = jax.random.PRNGKey(0)
    k1, k2, k3, k4, k5 = jax.random.split(key, 5)

    # Deterministic synthetic "backbone output" feature map (NCHW) and params
    x_fea_map = jax.random.normal(k1, (B, vision_dim, H, W), dtype=jnp.float32)
    seen_att = jax.random.normal(k2, (n_seen, attr_dim), dtype=jnp.float32)
    unseen_att = jax.random.normal(k3, (n_unseen, attr_dim), dtype=jnp.float32)
    # nn.Linear(vision_dim, attr_dim, bias=False).weight -> (attr_dim, vision_dim)
    v2s_weight = (jax.random.normal(k4, (attr_dim, vision_dim), dtype=jnp.float32)
                  * (1.0 / jnp.sqrt(vision_dim)))
    x_label = jax.random.randint(k5, (B,), 0, n_seen)

    # Eval branch: scaled cosine scores against all (seen + unseen) attributes
    scores = coarse_align_forward(x_fea_map, v2s_weight, seen_att, unseen_att,
                                  training=False)
    jax.block_until_ready(scores)
    assert scores.shape == (B, n_seen + n_unseen)

    # Training branch: V2S cross-entropy loss over seen classes
    loss = coarse_align_forward(x_fea_map, v2s_weight, seen_att, unseen_att,
                                x_label=x_label, training=True)
    jax.block_until_ready(loss)
    assert loss.shape == ()

    # Pure-JAX reference (matches the PyTorch forward) for a sanity check.
    def _ref(att, label=None):
        hi = jax.lax.Precision.HIGHEST
        xf = jnp.mean(x_fea_map.reshape(B, vision_dim, H * W), axis=-1)
        pre = jnp.dot(xf, v2s_weight.T, precision=hi)
        pre_n = pre / jnp.maximum(
            jnp.linalg.norm(pre, axis=-1, keepdims=True), 1e-12)
        att_n = att / jnp.maximum(
            jnp.linalg.norm(att, axis=-1, keepdims=True), 1e-12)
        s = SCALE_CLS * jnp.dot(pre_n, att_n.T, precision=hi)
        if label is None:
            return s
        lse = jax.nn.logsumexp(s, axis=-1)
        tgt = s[jnp.arange(B), label]
        return jnp.mean(lse - tgt)

    ref_scores = _ref(jnp.concatenate([seen_att, unseen_att], axis=0))
    ref_loss = _ref(seen_att, x_label)
    assert np.allclose(np.asarray(scores), np.asarray(ref_scores),
                       rtol=5e-2, atol=5e-2)
    assert np.allclose(np.asarray(loss), np.asarray(ref_loss),
                       rtol=5e-2, atol=5e-2)

    print("KERNEL_OK")
</pallas_src>

<mosaic_0001>
module attributes {stable_mosaic.version = 11 : i64} {
  func.func @coarse_scores_kernel(%arg0: i32, %arg1: i32, %arg2: memref<8x32x64xbf16, #tpu.memory_space<vmem>>, %arg3: memref<32x16xf32, #tpu.memory_space<vmem>>, %arg4: memref<16x128xf32, #tpu.memory_space<vmem>>, %arg5: memref<8x128xf32, #tpu.memory_space<vmem>>, %arg6: memref<8x16xf32, #tpu.memory_space<vmem>>) attributes {dimension_semantics = [#tpu.dimension_semantics<parallel>, #tpu.dimension_semantics<arbitrary>], iteration_bounds = array<i64: 1, 1>, scalar_prefetch = 0 : i64, scratch_operands = 1 : i64, tpu.core_type = #tpu.core_type<tc>, window_params = [{transform_indices = @transform_0, window_bounds = array<i64: 8, 32, 64>}, {transform_indices = @transform_1, window_bounds = array<i64: 32, 16>}, {pipeline_mode = #tpu.pipeline_mode<synchronous>, transform_indices = @transform_2, window_bounds = array<i64: 16, 128>}, {transform_indices = @transform_3, window_bounds = array<i64: 8, 128>}]} {
    %c0_i32 = arith.constant 0 : i32
    %0 = arith.cmpi eq, %arg1, %c0_i32 : i32
    %1 = arith.extui %0 : i1 to i32
    %c0_i32_0 = arith.constant 0 : i32
    %2 = arith.cmpi ne, %1, %c0_i32_0 : i32
    scf.if %2 {
      %cst_12 = arith.constant 0.000000e+00 : f32
      %14 = vector.broadcast %cst_12 : f32 to vector<8x16xf32>
      %c0_13 = arith.constant 0 : index
      %c0_14 = arith.constant 0 : index
      %15 = vector.load %arg6[%c0_13, %c0_14] : memref<8x16xf32, #tpu.memory_space<vmem>>, vector<8x16xf32>
      tpu.vector_store %arg6[%c0_13, %c0_14], %14 {strides = array<i32>} : memref<8x16xf32, #tpu.memory_space<vmem>>, vector<8x16xf32>,
    } else {
    }
    %c0 = arith.constant 0 : index
    %c0_1 = arith.constant 0 : index
    %c0_2 = arith.constant 0 : index
    %3 = vector.load %arg2[%c0, %c0_1, %c0_2] : memref<8x32x64xbf16, #tpu.memory_space<vmem>>, vector<8x32x64xbf16>
    %4 = arith.extf %3 : vector<8x32x64xbf16> to vector<8x32x64xf32>
    %cst = arith.constant dense<0.000000e+00> : vector<8x32xf32>
    %5 = vector.multi_reduction <add>, %4, %cst [2] : vector<8x32x64xf32> to vector<8x32xf32>
    %c0_3 = arith.constant 0 : index
    %c0_4 = arith.constant 0 : index
    %6 = vector.load %arg6[%c0_3, %c0_4] : memref<8x16xf32, #tpu.memory_space<vmem>>, vector<8x16xf32>
    %c0_5 = arith.constant 0 : index
    %c0_6 = arith.constant 0 : index
    %7 = vector.load %arg3[%c0_5, %c0_6] : memref<32x16xf32, #tpu.memory_space<vmem>>, vector<32x16xf32>
    %cst_7 = arith.constant dense<0.000000e+00> : vector<8x16xf32>
    %8 = tpu.matmul %5, %7, %cst_7 {dimension_numbers = #tpu.dot_dimension_numbers<[1], [0], [0], [1], [0, 0, 1, 1], [], []>} : vector<8x32xf32>, vector<32x16xf32>, vector<8x16xf32> -> vector<8x16xf32>
    %9 = arith.addf %6, %8 : vector<8x16xf32>
    %c0_8 = arith.constant 0 : index
    %c0_9 = arith.constant 0 : index
    %10 = vector.load %arg6[%c0_8, %c0_9] : memref<8x16xf32, #tpu.memory_space<vmem>>, vector<8x16xf32>
    tpu.vector_store %arg6[%c0_8, %c0_9], %9 {strides = array<i32>} : memref<8x16xf32, #tpu.memory_space<vmem>>, vector<8x16xf32>,
    %c0_i32_10 = arith.constant 0 : i32
    %11 = arith.cmpi eq, %arg1, %c0_i32_10 : i32
    %12 = arith.extui %11 : i1 to i32
    %c0_i32_11 = arith.constant 0 : i32
    %13 = arith.cmpi ne, %12, %c0_i32_11 : i32
    scf.if %13 {
      %c0_12 = arith.constant 0 : index
      %c0_13 = arith.constant 0 : index
      %14 = vector.load %arg6[%c0_12, %c0_13] : memref<8x16xf32, #tpu.memory_space<vmem>>, vector<8x16xf32>
      %15 = arith.mulf %14, %14 : vector<8x16xf32>
      %cst_14 = arith.constant dense<0.000000e+00> : vector<8xf32>
      %16 = vector.multi_reduction <add>, %15, %cst_14 [1] : vector<8x16xf32> to vector<8xf32>
      %17 = vector.shape_cast %16 : vector<8xf32> to vector<8x1xf32>
      %cst_15 = arith.constant 1.000000e-24 : f32
      %18 = vector.broadcast %cst_15 : f32 to vector<8x1xf32>
      %19 = arith.maximumf %17, %18 : vector<8x1xf32>
      %20 = math.rsqrt %19 : vector<8x1xf32>
      %21 = vector.broadcast %20 : vector<8x1xf32> to vector<8x16xf32>
      %22 = arith.mulf %14, %21 : vector<8x16xf32>
      %c0_16 = arith.constant 0 : index
      %c0_17 = arith.constant 0 : index
      %23 = vector.load %arg4[%c0_16, %c0_17] : memref<16x128xf32, #tpu.memory_space<vmem>>, vector<16x128xf32>
      %cst_18 = arith.constant dense<0.000000e+00> : vector<8x128xf32>
      %24 = tpu.matmul %22, %23, %cst_18 {dimension_numbers = #tpu.dot_dimension_numbers<[1], [0], [0], [1], [0, 0, 1, 1], [], []>} : vector<8x16xf32>, vector<16x128xf32>, vector<8x128xf32> -> vector<8x128xf32>
      %c0_19 = arith.constant 0 : index
      %c0_20 = arith.constant 0 : index
      %25 = vector.load %arg5[%c0_19, %c0_20] : memref<8x128xf32, #tpu.memory_space<vmem>>, vector<8x128xf32>
      tpu.vector_store %arg5[%c0_19, %c0_20], %24 {strides = array<i32>} : memref<8x128xf32, #tpu.memory_space<vmem>>, vector<8x128xf32>,
    } else {
    }
    return
  }
  func.func @transform_0(%arg0: i32, %arg1: i32) -> (i32, i32, i32) {
    %c0_i32 = arith.constant 0 : i32
    %c0_i32_0 = arith.constant 0 : i32
    return %arg0, %arg1, %c0_i32 : i32, i32, i32
  }
  func.func @transform_1(%arg0: i32, %arg1: i32) -> (i32, i32) {
    %c0_i32 = arith.constant 0 : i32
    %c0_i32_0 = arith.constant 0 : i32
    return %arg1, %c0_i32 : i32, i32
  }
  func.func @transform_2(%arg0: i32, %arg1: i32) -> (i32, i32) {
    %c0_i32 = arith.constant 0 : i32
    %c0_i32_0 = arith.constant 0 : i32
    %c0_i32_1 = arith.constant 0 : i32
    return %c0_i32, %c0_i32_0 : i32, i32
  }
  func.func @transform_3(%arg0: i32, %arg1: i32) -> (i32, i32) {
    %c0_i32 = arith.constant 0 : i32
    %c0_i32_0 = arith.constant 0 : i32
    return %arg0, %c0_i32 : i32, i32
  }
}

</mosaic_0001>

<llo_original>
// kernel: coarse_align_forward.1
$region0: #{coarse_align_forward.1}
  #allocation0 [shape = 'u32[]', space=smem, size = 0x4, offset = 0x4, fixed_abs, tag = 'smem constant byte address 0x4 - core index']
  #allocation1 [shape = 'u32[144,128]{1,0:T(1,128)}', space=vmem, size = 0x12000, scoped, tag = 'internal scratch']
  #allocation2 [shape = 'f32[8,16]{1,0:T(8,128)}', space=vmem, size = 0x1000, scoped, tag = 'scratch operand']
  %s0 = inlined_call_operand.vmem [shape: bf16[8,32,64], index: 0, kind: input, shape index: {}]
  %s1 = inlined_call_operand.vmem [shape: f32[32,16], index: 1, kind: input, shape index: {}]
  %s2 = inlined_call_operand.vmem [shape: f32[16,128], index: 2, kind: input, shape index: {}]
  %s3 = inlined_call_operand.vmem [shape: f32[8,128], index: 3, kind: output, shape index: {}]
  %s4 = sld [smem:[#allocation0]]
  $region30: #{coarse_align_forward.1} parent=0
    _
  %s6 = ssub.s32 1, %s4
  %s7 = scalar_select 0, %s6, %s4
  // Predicated region
  $region2: #{coarse_align_forward.1} parent=0 // pred_check
    _
  $region3: #{coarse_align_forward.1} parent=0 // pred_check_branch
    %9 = sbr.rel (0) target = $region5
  $region4: #{coarse_align_forward.1} parent=0 // pred_region
    _
  $region5: #{coarse_align_forward.1} parent=0 // pred_fallthru
    _
  // Predicated region
  $region6: #{coarse_align_forward.1} parent=0 // pred_check
    _
  $region7: #{coarse_align_forward.1} parent=0 // pred_check_branch
    %11 = sbr.rel (0) target = $region9
  $region8: #{coarse_align_forward.1} parent=0 // pred_region
    _
  $region9: #{coarse_align_forward.1} parent=0 // pred_fallthru
    _
  // Predicated region
  $region10: #{coarse_align_forward.1} parent=0 // pred_check
    _
  $region11: #{coarse_align_forward.1} parent=0 // pred_check_branch
    %13 = sbr.rel (0) target = $region13
  $region12: #{coarse_align_forward.1} parent=0 // pred_region
    _
  $region13: #{coarse_align_forward.1} parent=0 // pred_fallthru
    _
  %p14 = scmp.eq.s32.totalorder 0, 0
  // Predicated region
  $region14: #{coarse_align_forward.1} parent=0 // pred_check
    %p15 = pneg %p14
  $region15: #{coarse_align_forward.1} parent=0 // pred_check_branch
    %17 = sbr.rel (%p15) target = $region17
  $region16: #{coarse_align_forward.1} parent=0 // pred_region
    %vm18 = vcmask 130048
    %19 = vst.msk [vmem:[#allocation2] sm:$0xff] %vm18, 0.0
  $region17: #{coarse_align_forward.1} parent=0 // pred_fallthru
    _
  %v20 = vld [vmem:[%s0] sm:$0xf]
  %v21 = vld [vmem:[%s0 + $0x4] sm:$0xf]
  %v22 = vld [vmem:[%s0 + $0x8] sm:$0xf]
  %v23 = vld [vmem:[%s0 + $0xc] sm:$0xf]
  %v24 = vld [vmem:[%s0 + $0x10] sm:$0xf]
  %v25 = vld [vmem:[%s0 + $0x14] sm:$0xf]
  %v26 = vld [vmem:[%s0 + $0x18] sm:$0xf]
  %v27 = vld [vmem:[%s0 + $0x1c] sm:$0xf]
  %v28 = vld [vmem:[%s0 + $0x20] sm:$0xf]
  %v29 = vld [vmem:[%s0 + $0x24] sm:$0xf]
  %v30 = vld [vmem:[%s0 + $0x28] sm:$0xf]
  %v31 = vld [vmem:[%s0 + $0x2c] sm:$0xf]
  %v32 = vld [vmem:[%s0 + $0x30] sm:$0xf]
  %v33 = vld [vmem:[%s0 + $0x34] sm:$0xf]
  %v34 = vld [vmem:[%s0 + $0x38] sm:$0xf]
  %v35 = vld [vmem:[%s0 + $0x3c] sm:$0xf]
  %v36 = vld [vmem:[%s0 + $0x40] sm:$0xf]
  %v37 = vld [vmem:[%s0 + $0x44] sm:$0xf]
  %v38 = vld [vmem:[%s0 + $0x48] sm:$0xf]
  %v39 = vld [vmem:[%s0 + $0x4c] sm:$0xf]
  %v40 = vld [vmem:[%s0 + $0x50] sm:$0xf]
  %v41 = vld [vmem:[%s0 + $0x54] sm:$0xf]
  %v42 = vld [vmem:[%s0 + $0x58] sm:$0xf]
  %v43 = vld [vmem:[%s0 + $0x5c] sm:$0xf]
  %v44 = vld [vmem:[%s0 + $0x60] sm:$0xf]
  %v45 = vld [vmem:[%s0 + $0x64] sm:$0xf]
  %v46 = vld [vmem:[%s0 + $0x68] sm:$0xf]
  %v47 = vld [vmem:[%s0 + $0x6c] sm:$0xf]
  %v48 = vld [vmem:[%s0 + $0x70] sm:$0xf]
  %v49 = vld [vmem:[%s0 + $0x74] sm:$0xf]
  %v50 = vld [vmem:[%s0 + $0x78] sm:$0xf]
  %v51 = vld [vmem:[%s0 + $0x7c] sm:$0xf]
  %v52 = vunpack.c.l.bf16 %v20
  %v53 = vunpack.c.l.bf16 %v21
  %v54 = vunpack.c.l.bf16 %v22
  %v55 = vunpack.c.l.bf16 %v23
  %v56 = vunpack.c.l.bf16 %v24
  %v57 = vunpack.c.l.bf16 %v25
  %v58 = vunpack.c.l.bf16 %v26
  %v59 = vunpack.c.l.bf16 %v27
  %v60 = vunpack.c.l.bf16 %v28
  %v61 = vunpack.c.l.bf16 %v29
  %v62 = vunpack.c.l.bf16 %v30
  %v63 = vunpack.c.l.bf16 %v31
  %v64 = vunpack.c.l.bf16 %v32
  %v65 = vunpack.c.l.bf16 %v33
  %v66 = vunpack.c.l.bf16 %v34
  %v67 = vunpack.c.l.bf16 %v35
  %v68 = vunpack.c.l.bf16 %v36
  %v69 = vunpack.c.l.bf16 %v37
  %v70 = vunpack.c.l.bf16 %v38
  %v71 = vunpack.c.l.bf16 %v39
  %v72 = vunpack.c.l.bf16 %v40
  %v73 = vunpack.c.l.bf16 %v41
  %v74 = vunpack.c.l.bf16 %v42
  %v75 = vunpack.c.l.bf16 %v43
  %v76 = vunpack.c.l.bf16 %v44
  %v77 = vunpack.c.l.bf16 %v45
  %v78 = vunpack.c.l.bf16 %v46
  %v79 = vunpack.c.l.bf16 %v47
  %v80 = vunpack.c.l.bf16 %v48
  %v81 = vunpack.c.l.bf16 %v49
  %v82 = vunpack.c.l.bf16 %v50
  %v83 = vunpack.c.l.bf16 %v51
  %vm84 = vcmask 523264
  %v85 = vsel %vm84, %v52, 0.0
  %86 = vadd.xlane.f32.xlu0 %v85
  %v87 = vpop.xlane.xlu0 %86
  %v88 = vsel %vm84, %v53, 0.0
  %89 = vadd.xlane.f32.xlu0 %v88
  %v90 = vpop.xlane.xlu0 %89
  %v91 = vsel %vm84, %v54, 0.0
  %92 = vadd.xlane.f32.xlu0 %v91
  %v93 = vpop.xlane.xlu0 %92
  %v94 = vsel %vm84, %v55, 0.0
  %95 = vadd.xlane.f32.xlu0 %v94
  %v96 = vpop.xlane.xlu0 %95
  %v97 = vsel %vm84, %v56, 0.0
  %98 = vadd.xlane.f32.xlu0 %v97
  %v99 = vpop.xlane.xlu0 %98
  %v100 = vsel %vm84, %v57, 0.0
  %101 = vadd.xlane.f32.xlu0 %v100
  %v102 = vpop.xlane.xlu0 %101
  %v103 = vsel %vm84, %v58, 0.0
  %104 = vadd.xlane.f32.xlu0 %v103
  %v105 = vpop.xlane.xlu0 %104
  %v106 = vsel %vm84, %v59, 0.0
  %107 = vadd.xlane.f32.xlu0 %v106
  %v108 = vpop.xlane.xlu0 %107
  %v109 = vsel %vm84, %v60, 0.0
  %110 = vadd.xlane.f32.xlu0 %v109
  %v111 = vpop.xlane.xlu0 %110
  %v112 = vsel %vm84, %v61, 0.0
  %113 = vadd.xlane.f32.xlu0 %v112
  %v114 = vpop.xlane.xlu0 %113
  %v115 = vsel %vm84, %v62, 0.0
  %116 = vadd.xlane.f32.xlu0 %v115
  %v117 = vpop.xlane.xlu0 %116
  %v118 = vsel %vm84, %v63, 0.0
  %119 = vadd.xlane.f32.xlu0 %v118
  %v120 = vpop.xlane.xlu0 %119
  %v121 = vsel %vm84, %v64, 0.0
  %122 = vadd.xlane.f32.xlu0 %v121
  %v123 = vpop.xlane.xlu0 %122
  %v124 = vsel %vm84, %v65, 0.0
  %125 = vadd.xlane.f32.xlu0 %v124
  %v126 = vpop.xlane.xlu0 %125
  %v127 = vsel %vm84, %v66, 0.0
  %128 = vadd.xlane.f32.xlu0 %v127
  %v129 = vpop.xlane.xlu0 %128
  %v130 = vsel %vm84, %v67, 0.0
  %131 = vadd.xlane.f32.xlu0 %v130
  %v132 = vpop.xlane.xlu0 %131
  %v133 = vsel %vm84, %v68, 0.0
  %134 = vadd.xlane.f32.xlu0 %v133
  %v135 = vpop.xlane.xlu0 %134
  %v136 = vsel %vm84, %v69, 0.0
  %137 = vadd.xlane.f32.xlu0 %v136
  %v138 = vpop.xlane.xlu0 %137
  %v139 = vsel %vm84, %v70, 0.0
  %140 = vadd.xlane.f32.xlu0 %v139
  %v141 = vpop.xlane.xlu0 %140
  %v142 = vsel %vm84, %v71, 0.0
  %143 = vadd.xlane.f32.xlu0 %v142
  %v144 = vpop.xlane.xlu0 %143
  %v145 = vsel %vm84, %v72, 0.0
  %146 = vadd.xlane.f32.xlu0 %v145
  %v147 = vpop.xlane.xlu0 %146
  %v148 = vsel %vm84, %v73, 0.0
  %149 = vadd.xlane.f32.xlu0 %v148
  %v150 = vpop.xlane.xlu0 %149
  %v151 = vsel %vm84, %v74, 0.0
  %152 = vadd.xlane.f32.xlu0 %v151
  %v153 = vpop.xlane.xlu0 %152
  %v154 = vsel %vm84, %v75, 0.0
  %155 = vadd.xlane.f32.xlu0 %v154
  %v156 = vpop.xlane.xlu0 %155
  %v157 = vsel %vm84, %v76, 0.0
  %158 = vadd.xlane.f32.xlu0 %v157
  %v159 = vpop.xlane.xlu0 %158
  %v160 = vsel %vm84, %v77, 0.0
  %161 = vadd.xlane.f32.xlu0 %v160
  %v162 = vpop.xlane.xlu0 %161
  %v163 = vsel %vm84, %v78, 0.0
  %164 = vadd.xlane.f32.xlu0 %v163
  %v165 = vpop.xlane.xlu0 %164
  %v166 = vsel %vm84, %v79, 0.0
  %167 = vadd.xlane.f32.xlu0 %v166
  %v168 = vpop.xlane.xlu0 %167
  %v169 = vsel %vm84, %v80, 0.0
  %170 = vadd.xlane.f32.xlu0 %v169
  %v171 = vpop.xlane.xlu0 %170
  %v172 = vsel %vm84, %v81, 0.0
  %173 = vadd.xlane.f32.xlu0 %v172
  %v174 = vpop.xlane.xlu0 %173
  %v175 = vsel %vm84, %v82, 0.0
  %176 = vadd.xlane.f32.xlu0 %v175
  %v177 = vpop.xlane.xlu0 %176
  %v178 = vsel %vm84, %v83, 0.0
  %179 = vadd.xlane.f32.xlu0 %v178
  %v180 = vpop.xlane.xlu0 %179
  %v181 = vld [vmem:[#allocation2] sm:$0xff]
  %v182 = vld [vmem:[%s1] sm:$0xff]
  %v183 = vld [vmem:[%s1 + $0x8] sm:$0xff]
  %v184 = vld [vmem:[%s1 + $0x10] sm:$0xff]
  %v185 = vld [vmem:[%s1 + $0x18] sm:$0xff]
  %v218 = vlaneseq
  %v219 = vand.u32 %v218, 127
  %v220 = vlaneseq
  %v221 = vshrl.u32 %v220, 7
  %v222 = vsub.s32 %v219, %v221
  %v223 = vrot.slane %v87, %v222
  %v224 = vadd.s32 %v219, 4294967288
  %v225 = vlaneseq
  %v226 = vshrl.u32 %v225, 7
  %v227 = vsub.s32 %v224, %v226
  %v228 = vrot.slane %v90, %v227
  %vm229 = vcmask 130112
  %v230 = vsel %vm229, %v228, %v223
  %v231 = vadd.s32 %v219, 4294967280
  %v232 = vlaneseq
  %v233 = vshrl.u32 %v232, 7
  %v234 = vsub.s32 %v231, %v233
  %v235 = vrot.slane %v93, %v234
  %vm236 = vcmask 195712
  %v237 = vsel %vm236, %v235, %v230
  %v238 = vadd.s32 %v219, 4294967272
  %v239 = vlaneseq
  %v240 = vshrl.u32 %v239, 7
  %v241 = vsub.s32 %v238, %v240
  %v242 = vrot.slane %v96, %v241
  %vm243 = vcmask 261312
  %v244 = vsel %vm243, %v242, %v237
  %v245 = vlaneseq
  %v246 = vshrl.u32 %v245, 7
  %v247 = vsub.s32 %v219, %v246
  %v248 = vrot.slane %v99, %v247
  %v249 = vlaneseq
  %v250 = vshrl.u32 %v249, 7
  %v251 = vsub.s32 %v224, %v250
  %v252 = vrot.slane %v102, %v251
  %v253 = vsel %vm229, %v252, %v248
  %v254 = vlaneseq
  %v255 = vshrl.u32 %v254, 7
  %v256 = vsub.s32 %v231, %v255
  %v257 = vrot.slane %v105, %v256
  %v258 = vsel %vm236, %v257, %v253
  %v259 = vlaneseq
  %v260 = vshrl.u32 %v259, 7
  %v261 = vsub.s32 %v238, %v260
  %v262 = vrot.slane %v108, %v261
  %v263 = vsel %vm243, %v262, %v258
  %v264 = vlaneseq
  %v265 = vshrl.u32 %v264, 7
  %v266 = vsub.s32 %v219, %v265
  %v267 = vrot.slane %v111, %v266
  %v268 = vlaneseq
  %v269 = vshrl.u32 %v268, 7
  %v270 = vsub.s32 %v224, %v269
  %v271 = vrot.slane %v114, %v270
  %v272 = vsel %vm229, %v271, %v267
  %v273 = vlaneseq
  %v274 = vshrl.u32 %v273, 7
  %v275 = vsub.s32 %v231, %v274
  %v276 = vrot.slane %v117, %v275
  %v277 = vsel %vm236, %v276, %v272
  %v278 = vlaneseq
  %v279 = vshrl.u32 %v278, 7
  %v280 = vsub.s32 %v238, %v279
  %v281 = vrot.slane %v120, %v280
  %v282 = vsel %vm243, %v281, %v277
  %v283 = vlaneseq
  %v284 = vshrl.u32 %v283, 7
  %v285 = vsub.s32 %v219, %v284
  %v286 = vrot.slane %v123, %v285
  %v287 = vlaneseq
  %v288 = vshrl.u32 %v287, 7
  %v289 = vsub.s32 %v224, %v288
  %v290 = vrot.slane %v126, %v289
  %v291 = vsel %vm229, %v290, %v286
  %v292 = vlaneseq
  %v293 = vshrl.u32 %v292, 7
  %v294 = vsub.s32 %v231, %v293
  %v295 = vrot.slane %v129, %v294
  %v296 = vsel %vm236, %v295, %v291
  %v297 = vlaneseq
  %v298 = vshrl.u32 %v297, 7
  %v299 = vsub.s32 %v238, %v298
  %v300 = vrot.slane %v132, %v299
  %v301 = vsel %vm243, %v300, %v296
  %v302 = vlaneseq
  %v303 = vshrl.u32 %v302, 7
  %v304 = vsub.s32 %v219, %v303
  %v305 = vrot.slane %v135, %v304
  %v306 = vlaneseq
  %v307 = vshrl.u32 %v306, 7
  %v308 = vsub.s32 %v224, %v307
  %v309 = vrot.slane %v138, %v308
  %v310 = vsel %vm229, %v309, %v305
  %v311 = vlaneseq
  %v312 = vshrl.u32 %v311, 7
  %v313 = vsub.s32 %v231, %v312
  %v314 = vrot.slane %v141, %v313
  %v315 = vsel %vm236, %v314, %v310
  %v316 = vlaneseq
  %v317 = vshrl.u32 %v316, 7
  %v318 = vsub.s32 %v238, %v317
  %v319 = vrot.slane %v144, %v318
  %v320 = vsel %vm243, %v319, %v315
  %v321 = vlaneseq
  %v322 = vshrl.u32 %v321, 7
  %v323 = vsub.s32 %v219, %v322
  %v324 = vrot.slane %v147, %v323
  %v325 = vlaneseq
  %v326 = vshrl.u32 %v325, 7
  %v327 = vsub.s32 %v224, %v326
  %v328 = vrot.slane %v150, %v327
  %v329 = vsel %vm229, %v328, %v324
  %v330 = vlaneseq
  %v331 = vshrl.u32 %v330, 7
  %v332 = vsub.s32 %v231, %v331
  %v333 = vrot.slane %v153, %v332
  %v334 = vsel %vm236, %v333, %v329
  %v335 = vlaneseq
  %v336 = vshrl.u32 %v335, 7
  %v337 = vsub.s32 %v238, %v336
  %v338 = vrot.slane %v156, %v337
  %v339 = vsel %vm243, %v338, %v334
  %v340 = vlaneseq
  %v341 = vshrl.u32 %v340, 7
  %v342 = vsub.s32 %v219, %v341
  %v343 = vrot.slane %v159, %v342
  %v344 = vlaneseq
  %v345 = vshrl.u32 %v344, 7
  %v346 = vsub.s32 %v224, %v345
  %v347 = vrot.slane %v162, %v346
  %v348 = vsel %vm229, %v347, %v343
  %v349 = vlaneseq
  %v350 = vshrl.u32 %v349, 7
  %v351 = vsub.s32 %v231, %v350
  %v352 = vrot.slane %v165, %v351
  %v353 = vsel %vm236, %v352, %v348
  %v354 = vlaneseq
  %v355 = vshrl.u32 %v354, 7
  %v356 = vsub.s32 %v238, %v355
  %v357 = vrot.slane %v168, %v356
  %v358 = vsel %vm243, %v357, %v353
  %v359 = vlaneseq
  %v360 = vshrl.u32 %v359, 7
  %v361 = vsub.s32 %v219, %v360
  %v362 = vrot.slane %v171, %v361
  %v363 = vlaneseq
  %v364 = vshrl.u32 %v363, 7
  %v365 = vsub.s32 %v224, %v364
  %v366 = vrot.slane %v174, %v365
  %v367 = vsel %vm229, %v366, %v362
  %v368 = vlaneseq
  %v369 = vshrl.u32 %v368, 7
  %v370 = vsub.s32 %v231, %v369
  %v371 = vrot.slane %v177, %v370
  %v372 = vsel %vm236, %v371, %v367
  %v373 = vlaneseq
  %v374 = vshrl.u32 %v373, 7
  %v375 = vsub.s32 %v238, %v374
  %v376 = vrot.slane %v180, %v375
  %v377 = vsel %vm243, %v376, %v372
  %vm378 = vcmask 1041409
  %v379 = vsel %vm378, %v263, %v244
  %vm380 = vcmask 1042434
  %v381 = vsel %vm380, %v282, %v379
  %vm382 = vcmask 1043459
  %v383 = vsel %vm382, %v301, %v381
  %vm384 = vcmask 1044484
  %v385 = vsel %vm384, %v320, %v383
  %vm386 = vcmask 1045509
  %v387 = vsel %vm386, %v339, %v385
  %vm388 = vcmask 1046534
  %v389 = vsel %vm388, %v358, %v387
  %vm390 = vcmask 1047559
  %v391 = vsel %vm390, %v377, %v389
  %vm392 = vcmask 261120
  %v393 = vsel %vm392, %v391, 0
  %395 = vmatprep.subr.mxu0 0.0
  %396 = vmatpush1.msra.mxu0 0.0
  %397 = vmatprep.subr.mxu0 0.0
  %398 = vmatpush1.msra.mxu0 0.0
  %399 = vmatprep.subr.mxu0 0.0
  %400 = vmatpush1.msra.mxu0 0.0
  %401 = vmatprep.subr.mxu0 0.0
  %402 = vmatpush1.msra.mxu0 0.0
  %403 = vmatprep.subr.mxu0 0.0
  %404 = vmatpush1.msra.mxu0 0.0
  %405 = vmatprep.subr.mxu0 0.0
  %406 = vmatpush1.msra.mxu0 0.0
  %407 = vmatprep.subr.mxu0 0.0
  %408 = vmatpush1.msra.mxu0 0.0
  %409 = vmatprep.subr.mxu0 0.0
  %410 = vmatpush1.msra.mxu0 0.0
  %411 = vmatprep.subr.mxu0 0.0
  %412 = vmatpush1.msra.mxu0 0.0
  %413 = vmatprep.subr.mxu0 0.0
  %414 = vmatpush1.msra.mxu0 0.0
  %415 = vmatprep.subr.mxu0 0.0
  %416 = vmatpush1.msra.mxu0 0.0
  %417 = vmatprep.subr.mxu0 0.0
  %418 = vmatpush1.msra.mxu0 0.0
  %419 = vmatprep.subr.mxu0 0.0
  %420 = vmatpush1.msra.mxu0 %v185
  %421 = vmatprep.subr.mxu0 0.0
  %422 = vmatpush1.msra.mxu0 %v184
  %423 = vmatprep.subr.mxu0 0.0
  %424 = vmatpush1.msra.mxu0 %v183
  %425 = vmatprep.subr.mxu0 0.0
  %426 = vmatpush1.msra.mxu0 %v182
  %427 = vmatprep.subr.mxu0 0.0
  %428 = vmatpush2.msra.mxu0 0.0
  %429 = vmatprep.subr.mxu0 0.0
  %430 = vmatpush2.msra.mxu0 0.0
  %431 = vmatprep.subr.mxu0 0.0
  %432 = vmatpush2.msra.mxu0 0.0
  %433 = vmatprep.subr.mxu0 0.0
  %434 = vmatpush2.msra.mxu0 0.0
  %435 = vmatprep.subr.mxu0 0.0
  %436 = vmatpush2.msra.mxu0 0.0
  %437 = vmatprep.subr.mxu0 0.0
  %438 = vmatpush2.msra.mxu0 0.0
  %439 = vmatprep.subr.mxu0 0.0
  %440 = vmatpush2.msra.mxu0 0.0
  %441 = vmatprep.subr.mxu0 0.0
  %442 = vmatpush2.msra.mxu0 0.0
  %443 = vmatprep.subr.mxu0 0.0
  %444 = vmatpush2.msra.mxu0 0.0
  %445 = vmatprep.subr.mxu0 0.0
  %446 = vmatpush2.msra.mxu0 0.0
  %447 = vmatprep.subr.mxu0 0.0
  %448 = vmatpush2.msra.mxu0 0.0
  %449 = vmatprep.subr.mxu0 0.0
  %450 = vmatpush2.msra.mxu0 0.0
  %451 = vmatprep.subr.mxu0 0.0
  %452 = vmatpush2.msra.mxu0 0.0
  %453 = vmatprep.subr.mxu0 0.0
  %454 = vmatpush2.msra.mxu0 0.0
  %455 = vmatprep.subr.mxu0 0.0
  %456 = vmatpush2.msra.mxu0 0.0
  %457 = vmatprep.subr.mxu0 0.0
  %458 = vmatpush2.msra.mxu0 0.0
  %459 = vmatprep.mubr.f32.mxu0 0.0
  %460 = vmatmul.mubr.f32.gmra.mxu0 %v393
  %v461 = vpop.f32.mrf.mxu0
  %v462 = vadd.f32 0.0, %v461
  %v463 = vpop.f32.mrf.mxu0
  %464 = vdwg.mxu0
  %v465 = vadd.f32 %v181, %v462
  %vm466 = vcmask 130048
  %467 = vst.msk [vmem:[#allocation2] sm:$0xff] %vm466, %v465
  // Predicated region
  $region18: #{coarse_align_forward.1} parent=0 // pred_check
    %p468 = pneg %p14
  $region19: #{coarse_align_forward.1} parent=0 // pred_check_branch
    %470 = sbr.rel (%p468) target = $region21
  $region20: #{coarse_align_forward.1} parent=0 // pred_region
    %v471 = vld [vmem:[#allocation2] sm:$0xff]
    %v472 = vmul.f32 %v471, %v471
    %v473 = vsel %vm466, %v472, 0.0
    %474 = vadd.xlane.f32.xlu0 %v473
    %v475 = vpop.xlane.xlu0 %474
    %v476 = vmax.f32 %v475, 1e-24
    %v477 = vrsqrt.pop %v476
    %v478 = vmul.f32 %v471, %v477
    %v479 = vld [vmem:[%s2] sm:$0xff]
    %v480 = vld [vmem:[%s2 + $0x8] sm:$0xff]
    %v482 = vsel %vm466, %v478, 0
    %484 = vmatprep.subr.mxu0 0.0
    %485 = vmatpush1.msra.mxu0 0.0
    %486 = vmatprep.subr.mxu0 0.0
    %487 = vmatpush1.msra.mxu0 0.0
    %488 = vmatprep.subr.mxu0 0.0
    %489 = vmatpush1.msra.mxu0 0.0
    %490 = vmatprep.subr.mxu0 0.0
    %491 = vmatpush1.msra.mxu0 0.0
    %492 = vmatprep.subr.mxu0 0.0
    %493 = vmatpush1.msra.mxu0 0.0
    %494 = vmatprep.subr.mxu0 0.0
    %495 = vmatpush1.msra.mxu0 0.0
    %496 = vmatprep.subr.mxu0 0.0
    %497 = vmatpush1.msra.mxu0 0.0
    %498 = vmatprep.subr.mxu0 0.0
    %499 = vmatpush1.msra.mxu0 0.0
    %500 = vmatprep.subr.mxu0 0.0
    %501 = vmatpush1.msra.mxu0 0.0
    %502 = vmatprep.subr.mxu0 0.0
    %503 = vmatpush1.msra.mxu0 0.0
    %504 = vmatprep.subr.mxu0 0.0
    %505 = vmatpush1.msra.mxu0 0.0
    %506 = vmatprep.subr.mxu0 0.0
    %507 = vmatpush1.msra.mxu0 0.0
    %508 = vmatprep.subr.mxu0 0.0
    %509 = vmatpush1.msra.mxu0 0.0
    %510 = vmatprep.subr.mxu0 0.0
    %511 = vmatpush1.msra.mxu0 0.0
    %512 = vmatprep.subr.mxu0 0.0
    %513 = vmatpush1.msra.mxu0 %v480
    %514 = vmatprep.subr.mxu0 0.0
    %515 = vmatpush1.msra.mxu0 %v479
    %516 = vmatprep.subr.mxu0 0.0
    %517 = vmatpush2.msra.mxu0 0.0
    %518 = vmatprep.subr.mxu0 0.0
    %519 = vmatpush2.msra.mxu0 0.0
    %520 = vmatprep.subr.mxu0 0.0
    %521 = vmatpush2.msra.mxu0 0.0
    %522 = vmatprep.subr.mxu0 0.0
    %523 = vmatpush2.msra.mxu0 0.0
    %524 = vmatprep.subr.mxu0 0.0
    %525 = vmatpush2.msra.mxu0 0.0
    %526 = vmatprep.subr.mxu0 0.0
    %527 = vmatpush2.msra.mxu0 0.0
    %528 = vmatprep.subr.mxu0 0.0
    %529 = vmatpush2.msra.mxu0 0.0
    %530 = vmatprep.subr.mxu0 0.0
    %531 = vmatpush2.msra.mxu0 0.0
    %532 = vmatprep.subr.mxu0 0.0
    %533 = vmatpush2.msra.mxu0 0.0
    %534 = vmatprep.subr.mxu0 0.0
    %535 = vmatpush2.msra.mxu0 0.0
    %536 = vmatprep.subr.mxu0 0.0
    %537 = vmatpush2.msra.mxu0 0.0
    %538 = vmatprep.subr.mxu0 0.0
    %539 = vmatpush2.msra.mxu0 0.0
    %540 = vmatprep.subr.mxu0 0.0
    %541 = vmatpush2.msra.mxu0 0.0
    %542 = vmatprep.subr.mxu0 0.0
    %543 = vmatpush2.msra.mxu0 0.0
    %544 = vmatprep.subr.mxu0 0.0
    %545 = vmatpush2.msra.mxu0 0.0
    %546 = vmatprep.subr.mxu0 0.0
    %547 = vmatpush2.msra.mxu0 0.0
    %548 = vmatprep.mubr.f32.mxu0 0.0
    %549 = vmatmul.mubr.f32.gmra.mxu0 %v482
    %v550 = vpop.f32.mrf.mxu0
    %v551 = vadd.f32 0.0, %v550
    %v552 = vpop.f32.mrf.mxu0
    %553 = vdwg.mxu0
    %554 = vst [vmem:[%s3] sm:$0xff] %v551
  $region21: #{coarse_align_forward.1} parent=0 // pred_fallthru
    _
  // Predicated region
  $region22: #{coarse_align_forward.1} parent=0 // pred_check
    _
  $region23: #{coarse_align_forward.1} parent=0 // pred_check_branch
    %556 = sbr.rel (0) target = $region25
  $region24: #{coarse_align_forward.1} parent=0 // pred_region
    _
  $region25: #{coarse_align_forward.1} parent=0 // pred_fallthru
    _
  // Predicated region
  $region26: #{coarse_align_forward.1} parent=0 // pred_check
    _
  $region27: #{coarse_align_forward.1} parent=0 // pred_check_branch
    %558 = sbr.rel (0) target = $region29
  $region28: #{coarse_align_forward.1} parent=0 // pred_region
    _
  $region29: #{coarse_align_forward.1} parent=0 // pred_fallthru
    _

</llo_original>
